<compile_context>
chip_gen: v6e
topology: v6e:2x2x1
jax: 0.10.0
libtpu: 0.0.40
codegen_flags: <defaults>
</compile_context>

<pallas_src>
import functools

import numpy as np

import jax
import jax.numpy as jnp
from jax import lax
from jax.experimental import pallas as pl
from jax.experimental.pallas import tpu as pltpu


# ----------------------------- fused kernel ----------------------------------

def _fused_ir_kernel(*refs, stride, has_expand, H, W, imgs):
    """imgs images per grid step: expand(1x1) -> dw(3x3) -> project(1x1)."""
    idx = 0
    x_ref = refs[idx]; idx += 1
    if has_expand:
        w_exp_ref = refs[idx]; b1_ref = refs[idx + 1]; idx += 2
    w_dw_ref = refs[idx]; b2_ref = refs[idx + 1]; mask_ref = refs[idx + 2]
    w_proj_ref = refs[idx + 3]; b3_ref = refs[idx + 4]; idx += 5
    sel_ref = None
    if stride > 1:
        sel_ref = refs[idx]; idx += 1
    o_ref = refs[idx]

    HW = H * W
    # Hoist all weight / bias / mask loads out of the per-image loop.
    wd = w_dw_ref[...]                      # (Chid, 9)   f32, BN scale folded
    msk = mask_ref[...]                     # (9, HW)     f32 0/1 border masks
    wp = w_proj_ref[...]                    # (Cout, Chid) bf16, BN scale folded
    b2c = b2_ref[...]                       # (Chid, 1)   f32
    b3c = b3_ref[...]                       # (Cout, 1)   f32
    Chid = wd.shape[0]
    if has_expand:
        we = w_exp_ref[...]                 # (Chid, Cin) bf16, BN scale folded
        b1c = b1_ref[...]                   # (Chid, 1)   f32
    if sel_ref is not None:
        sel = sel_ref[...]                  # (HW, Ho*Wo) bf16 0/1 subsampler

    for b in range(imgs):
        # ---- stage 1: 1x1 expand (bf16 MXU, f32 accum) + bias + ReLU6 -------
        if has_expand:
            xb = x_ref[b].astype(jnp.bfloat16)                  # (Cin, HW)
            h = jnp.dot(we, xb, preferred_element_type=jnp.float32)
            h = jnp.clip(h + b1c, 0.0, 6.0)                     # (Chid, HW) f32
        else:
            h = x_ref[b].astype(jnp.float32)                    # (Chid, HW)

        # ---- stage 2: 3x3 depthwise (stride-1, VPU f32) + bias + ReLU6 ------
        # Taps are lane shifts of the resident hidden; out-of-image sources
        # are zeroed with precomputed 0/1 masks.  Accumulator starts at the
        # folded BN bias (no zeros / no extra add).
        acc = jnp.broadcast_to(b2c, (Chid, HW))
        for kh in range(3):
            for kw in range(3):
                k = kh * 3 + kw
                delta = (kh - 1) * W + (kw - 1)
                # tap[:, p] = h[:, p + delta]; wrap positions are masked off.
                tap = h if delta == 0 else jnp.roll(h, -delta, axis=1)
                if not (kh == 1 and kw == 1):
                    tap = tap * msk[k:k + 1, :]
                acc = acc + tap * wd[:, k:k + 1]
        y = jnp.clip(acc, 0.0, 6.0).astype(jnp.bfloat16)        # (Chid, HW)

        # stride > 1: subsample spatial positions with an exact 0/1 matmul.
        if sel_ref is not None:
            y = jnp.dot(y, sel, preferred_element_type=jnp.float32
                        ).astype(jnp.bfloat16)                  # (Chid, Ho*Wo)

        # ---- stage 3: 1x1 project (bf16 MXU, f32 accum) + bias --------------
        z = jnp.dot(wp, y, preferred_element_type=jnp.float32)  # (Cout, Ho*Wo)
        o_ref[b] = (z + b3c).astype(o_ref.dtype)


# ----------------------------- small static helpers ---------------------------

def _border_masks(H, W):
    """(9, H*W) 0/1 masks: tap (kh,kw) valid iff its source is inside the image."""
    p = np.arange(H * W)
    i, j = p // W, p % W
    m = np.zeros((9, H * W), np.float32)
    for kh in range(3):
        for kw in range(3):
            ok = ((i + kh - 1 >= 0) & (i + kh - 1 < H) &
                  (j + kw - 1 >= 0) & (j + kw - 1 < W))
            m[kh * 3 + kw] = ok
    return jnp.asarray(m)


def _subsample_matrix(H, W, stride):
    """(H*W, Ho*Wo) 0/1 matrix selecting the stride-s output positions."""
    Ho = (H - 1) // stride + 1
    Wo = (W - 1) // stride + 1
    o = np.arange(Ho * Wo)
    src = (o // Wo) * stride * W + (o % Wo) * stride
    S = np.zeros((H * W, Ho * Wo), np.float32)
    S[src, o] = 1.0
    return jnp.asarray(S, dtype=jnp.bfloat16)


# ----------------------------- wrapper ----------------------------------------

def inverted_residuals_forward(x_nchw, params, *, stride, expand_ratio,
                               images_per_block=1):
    """Fused Pallas forward of InvertedResiduals. Input/output NCHW (like torch).

    images_per_block: images processed per grid step.  Use 1 (default) to keep
    >=2 grid steps for v7x megacore; use N on single-TC parts (v5e/v6e) to
    amortise the per-grid-step overhead over the whole batch.
    """
    N, Cin, H, W = x_nchw.shape
    Chid = params["w_dw"].shape[1]
    Cout = params["w_proj"].shape[1]
    Ho = (H + 2 - 3) // stride + 1
    Wo = (W + 2 - 3) // stride + 1
    HW = H * W
    has_expand = expand_ratio != 1
    B = images_per_block
    assert N % B == 0, (N, B)
    steps = N // B

    # Fold eval-mode BN scale into the conv weights; keep only bias adds in the
    # kernel.  Everything is transposed to channel-major (channels on sublanes,
    # spatial on lanes).  Pointwise weights pre-cast to bf16 for the MXU; the
    # depthwise weight stays f32 (VPU path).
    w_dwT = jnp.transpose(params["w_dw"] * params["s2"][None, :])        # (Chid, 9)
    w_projT = jnp.transpose(
        params["w_proj"] * params["s3"][None, :]).astype(jnp.bfloat16)   # (Cout, Chid)
    b2c = params["b2"].reshape(Chid, 1)
    b3c = params["b3"].reshape(Cout, 1)
    masks = _border_masks(H, W)                                          # (9, HW)

    x_cm = x_nchw.reshape(N, Cin, HW)          # free metadata reshape, lane-dense

    inputs = [x_cm]
    in_specs = [pl.BlockSpec((B, Cin, HW), lambda n: (n, 0, 0))]
    if has_expand:
        w_expT = jnp.transpose(
            params["w_expand"] * params["s1"][None, :]).astype(jnp.bfloat16)  # (Chid, Cin)
        b1c = params["b1"].reshape(Chid, 1)
        inputs += [w_expT, b1c]
        in_specs += [pl.BlockSpec((Chid, Cin), lambda n: (0, 0)),
                     pl.BlockSpec((Chid, 1), lambda n: (0, 0))]
    inputs += [w_dwT, b2c, masks, w_projT, b3c]
    in_specs += [pl.BlockSpec((Chid, 9), lambda n: (0, 0)),
                 pl.BlockSpec((Chid, 1), lambda n: (0, 0)),
                 pl.BlockSpec((9, HW), lambda n: (0, 0)),
                 pl.BlockSpec((Cout, Chid), lambda n: (0, 0)),
                 pl.BlockSpec((Cout, 1), lambda n: (0, 0))]
    if stride > 1:
        sel = _subsample_matrix(H, W, stride)                            # (HW, Ho*Wo)
        inputs.append(sel)
        in_specs.append(pl.BlockSpec((HW, Ho * Wo), lambda n: (0, 0)))

    out = pl.pallas_call(
        functools.partial(_fused_ir_kernel, stride=stride,
                          has_expand=has_expand, H=H, W=W, imgs=B),
        out_shape=jax.ShapeDtypeStruct((N, Cout, Ho * Wo), x_nchw.dtype),
        grid_spec=pltpu.PrefetchScalarGridSpec(
            num_scalar_prefetch=0,
            grid=(steps,),
            in_specs=in_specs,
            out_specs=pl.BlockSpec((B, Cout, Ho * Wo), lambda n: (n, 0, 0)),
        ),
        compiler_params=pltpu.CompilerParams(
            dimension_semantics=("parallel",),
            vmem_limit_bytes=32 * 1024 * 1024),
    )(*inputs)

    return out.reshape(N, Cout, Ho, Wo)        # already NCHW, no transpose


# ----------------------------- pure-JAX reference -----------------------------

def reference_forward(x_nchw, params, *, stride, expand_ratio):
    x = jnp.transpose(x_nchw, (0, 2, 3, 1))
    Chid = params["w_dw"].shape[1]
    dn = ("NHWC", "HWIO", "NHWC")
    if expand_ratio != 1:
        w = params["w_expand"][None, None]                    # (1,1,Cin,Chid)
        x = lax.conv_general_dilated(x, w, (1, 1), "VALID", dimension_numbers=dn)
        x = jnp.clip(x * params["s1"] + params["b1"], 0.0, 6.0)
    wd = params["w_dw"].reshape(3, 3, Chid)[:, :, None, :]    # (3,3,1,Chid)
    x = lax.conv_general_dilated(x, wd, (stride, stride), ((1, 1), (1, 1)),
                                 dimension_numbers=dn, feature_group_count=Chid)
    x = jnp.clip(x * params["s2"] + params["b2"], 0.0, 6.0)
    wp = params["w_proj"][None, None]                         # (1,1,Chid,Cout)
    x = lax.conv_general_dilated(x, wp, (1, 1), "VALID", dimension_numbers=dn)
    x = x * params["s3"] + params["b3"]
    return jnp.transpose(x, (0, 3, 1, 2))


# ----------------------------- setup / main -----------------------------------

def make_params(key, in_panel, out_panel, expand_ratio):
    hidden = in_panel * expand_ratio
    ks = jax.random.split(key, 15)

    def bn_fold(k0, k1, k2, k3, C):
        gamma = 1.0 + 0.1 * jax.random.normal(k0, (C,), jnp.float32)
        beta = 0.1 * jax.random.normal(k1, (C,), jnp.float32)
        mean = 0.1 * jax.random.normal(k2, (C,), jnp.float32)
        var = jnp.abs(jax.random.normal(k3, (C,), jnp.float32)) + 0.5
        scale = gamma / jnp.sqrt(var + 1e-5)
        bias = beta - mean * scale
        return scale, bias

    s1, b1 = bn_fold(ks[3], ks[4], ks[5], ks[6], hidden)
    s2, b2 = bn_fold(ks[7], ks[8], ks[9], ks[10], hidden)
    s3, b3 = bn_fold(ks[11], ks[12], ks[13], ks[14], out_panel)
    return {
        # 1x1 expand: torch weight (hidden, in, 1, 1) stored as (in, hidden)
        "w_expand": 0.1 * jax.random.normal(ks[0], (in_panel, hidden), jnp.float32),
        # 3x3 depthwise: torch weight (hidden, 1, 3, 3) stored as (9, hidden)
        "w_dw": 0.1 * jax.random.normal(ks[1], (9, hidden), jnp.float32),
        # 1x1 project: torch weight (out, hidden, 1, 1) stored as (hidden, out)
        "w_proj": 0.1 * jax.random.normal(ks[2], (hidden, out_panel), jnp.float32),
        "s1": s1, "b1": b1, "s2": s2, "b2": b2, "s3": s3, "b3": b3,
    }


if __name__ == "__main__":
    N, H, W = 2, 16, 16
    configs = [
        # (in, out, stride, expand, images_per_block)
        dict(in_panel=8,  out_panel=16, stride=1, expand_ratio=4, images_per_block=1),
        dict(in_panel=8,  out_panel=16, stride=2, expand_ratio=4, images_per_block=2),
        dict(in_panel=16, out_panel=16, stride=1, expand_ratio=1, images_per_block=2),
    ]

    key = jax.random.PRNGKey(0)
    for cfg in configs:
        key, kx, kp = jax.random.split(key, 3)
        x = jax.random.normal(kx, (N, cfg["in_panel"], H, W), jnp.float32)  # NCHW
        params = make_params(kp, cfg["in_panel"], cfg["out_panel"],
                             cfg["expand_ratio"])

        out = inverted_residuals_forward(
            x, params, stride=cfg["stride"], expand_ratio=cfg["expand_ratio"],
            images_per_block=cfg["images_per_block"])
        out = jax.block_until_ready(out)

        ref = jax.block_until_ready(
            reference_forward(x, params, stride=cfg["stride"],
                              expand_ratio=cfg["expand_ratio"]))

        Ho = (H + 2 - 3) // cfg["stride"] + 1
        assert out.shape == (N, cfg["out_panel"], Ho, Ho), (cfg, out.shape)
        # Kernel uses bf16 MXU inputs (f32 accumulation) vs a pure-f32 reference.
        err = float(jnp.max(jnp.abs(out - ref)))
        assert jnp.allclose(out, ref, atol=2e-2, rtol=2e-2), (cfg, err)

    print("KERNEL_OK")
</pallas_src>

<mosaic_0001>
module attributes {stable_mosaic.version = 11 : i64} {
  func.func @_fused_ir_kernel(%arg0: i32, %arg1: memref<1x8x256xf32, #tpu.memory_space<vmem>>, %arg2: memref<32x8xbf16, #tpu.memory_space<vmem>>, %arg3: memref<32x1xf32, #tpu.memory_space<vmem>>, %arg4: memref<32x9xf32, #tpu.memory_space<vmem>>, %arg5: memref<32x1xf32, #tpu.memory_space<vmem>>, %arg6: memref<9x256xf32, #tpu.memory_space<vmem>>, %arg7: memref<16x32xbf16, #tpu.memory_space<vmem>>, %arg8: memref<16x1xf32, #tpu.memory_space<vmem>>, %arg9: memref<1x16x256xf32, #tpu.memory_space<vmem>>) attributes {dimension_semantics = [#tpu.dimension_semantics<parallel>], iteration_bounds = array<i64: 2>, scalar_prefetch = 0 : i64, scratch_operands = 0 : i64, tpu.core_type = #tpu.core_type<tc>, window_params = [{transform_indices = @transform_0, window_bounds = array<i64: 1, 8, 256>}, {pipeline_mode = #tpu.pipeline_mode<synchronous>, transform_indices = @transform_1, window_bounds = array<i64: 32, 8>}, {pipeline_mode = #tpu.pipeline_mode<synchronous>, transform_indices = @transform_2, window_bounds = array<i64: 32, 1>}, {pipeline_mode = #tpu.pipeline_mode<synchronous>, transform_indices = @transform_3, window_bounds = array<i64: 32, 9>}, {pipeline_mode = #tpu.pipeline_mode<synchronous>, transform_indices = @transform_4, window_bounds = array<i64: 32, 1>}, {pipeline_mode = #tpu.pipeline_mode<synchronous>, transform_indices = @transform_5, window_bounds = array<i64: 9, 256>}, {pipeline_mode = #tpu.pipeline_mode<synchronous>, transform_indices = @transform_6, window_bounds = array<i64: 16, 32>}, {pipeline_mode = #tpu.pipeline_mode<synchronous>, transform_indices = @transform_7, window_bounds = array<i64: 16, 1>}, {transform_indices = @transform_8, window_bounds = array<i64: 1, 16, 256>}]} {
    %c0 = arith.constant 0 : index
    %c0_0 = arith.constant 0 : index
    %0 = vector.load %arg4[%c0, %c0_0] : memref<32x9xf32, #tpu.memory_space<vmem>>, vector<32x9xf32>
    %c0_1 = arith.constant 0 : index
    %c0_2 = arith.constant 0 : index
    %1 = vector.load %arg6[%c0_1, %c0_2] : memref<9x256xf32, #tpu.memory_space<vmem>>, vector<9x256xf32>
    %c0_3 = arith.constant 0 : index
    %c0_4 = arith.constant 0 : index
    %2 = vector.load %arg7[%c0_3, %c0_4] : memref<16x32xbf16, #tpu.memory_space<vmem>>, vector<16x32xbf16>
    %c0_5 = arith.constant 0 : index
    %c0_6 = arith.constant 0 : index
    %3 = vector.load %arg5[%c0_5, %c0_6] : memref<32x1xf32, #tpu.memory_space<vmem>>, vector<32x1xf32>
    %c0_7 = arith.constant 0 : index
    %c0_8 = arith.constant 0 : index
    %4 = vector.load %arg8[%c0_7, %c0_8] : memref<16x1xf32, #tpu.memory_space<vmem>>, vector<16x1xf32>
    %c0_9 = arith.constant 0 : index
    %c0_10 = arith.constant 0 : index
    %5 = vector.load %arg2[%c0_9, %c0_10] : memref<32x8xbf16, #tpu.memory_space<vmem>>, vector<32x8xbf16>
    %c0_11 = arith.constant 0 : index
    %c0_12 = arith.constant 0 : index
    %6 = vector.load %arg3[%c0_11, %c0_12] : memref<32x1xf32, #tpu.memory_space<vmem>>, vector<32x1xf32>
    %c0_13 = arith.constant 0 : index
    %c0_14 = arith.constant 0 : index
    %c0_15 = arith.constant 0 : index
    %7 = vector.load %arg1[%c0_13, %c0_14, %c0_15] : memref<1x8x256xf32, #tpu.memory_space<vmem>>, vector<1x8x256xf32>
    %8 = vector.shape_cast %7 : vector<1x8x256xf32> to vector<8x256xf32>
    %9 = arith.truncf %8 : vector<8x256xf32> to vector<8x256xbf16>
    %cst = arith.constant dense<0.000000e+00> : vector<32x256xf32>
    %10 = tpu.matmul %5, %9, %cst {dimension_numbers = #tpu.dot_dimension_numbers<[1], [0], [0], [1], [0, 0, 1, 1], [], []>} : vector<32x8xbf16>, vector<8x256xbf16>, vector<32x256xf32> -> vector<32x256xf32>
    %11 = vector.broadcast %6 : vector<32x1xf32> to vector<32x256xf32>
    %12 = arith.addf %10, %11 : vector<32x256xf32>
    %cst_16 = arith.constant 0.000000e+00 : f32
    %cst_17 = arith.constant 6.000000e+00 : f32
    %13 = vector.broadcast %cst_16 : f32 to vector<32x256xf32>
    %14 = arith.maximumf %13, %12 : vector<32x256xf32>
    %15 = vector.broadcast %cst_17 : f32 to vector<32x256xf32>
    %16 = arith.minimumf %15, %14 : vector<32x256xf32>
    %17 = vector.shape_cast %3 : vector<32x1xf32> to vector<32x1xf32>
    %18 = vector.broadcast %17 : vector<32x1xf32> to vector<32x256xf32>
    %19 = vector.extract_strided_slice %16 {offsets = [0, 239], sizes = [32, 17], strides = [1, 1]} : vector<32x256xf32> to vector<32x17xf32>
    %20 = vector.extract_strided_slice %16 {offsets = [0, 0], sizes = [32, 239], strides = [1, 1]} : vector<32x256xf32> to vector<32x239xf32>
    %21 = tpu.concatenate %19, %20 in 1 : vector<32x17xf32>, vector<32x239xf32> -> vector<32x256xf32>
    %22 = vector.extract_strided_slice %1 {offsets = [0, 0], sizes = [1, 256], strides = [1, 1]} : vector<9x256xf32> to vector<1x256xf32>
    %23 = vector.broadcast %22 : vector<1x256xf32> to vector<32x256xf32>
    %24 = arith.mulf %21, %23 : vector<32x256xf32>
    %25 = vector.extract_strided_slice %0 {offsets = [0, 0], sizes = [32, 1], strides = [1, 1]} : vector<32x9xf32> to vector<32x1xf32>
    %26 = vector.broadcast %25 : vector<32x1xf32> to vector<32x256xf32>
    %27 = arith.mulf %24, %26 : vector<32x256xf32>
    %28 = arith.addf %18, %27 : vector<32x256xf32>
    %29 = vector.extract_strided_slice %16 {offsets = [0, 240], sizes = [32, 16], strides = [1, 1]} : vector<32x256xf32> to vector<32x16xf32>
    %30 = vector.extract_strided_slice %16 {offsets = [0, 0], sizes = [32, 240], strides = [1, 1]} : vector<32x256xf32> to vector<32x240xf32>
    %31 = tpu.concatenate %29, %30 in 1 : vector<32x16xf32>, vector<32x240xf32> -> vector<32x256xf32>
    %32 = vector.extract_strided_slice %1 {offsets = [1, 0], sizes = [1, 256], strides = [1, 1]} : vector<9x256xf32> to vector<1x256xf32>
    %33 = vector.broadcast %32 : vector<1x256xf32> to vector<32x256xf32>
    %34 = arith.mulf %31, %33 : vector<32x256xf32>
    %35 = vector.extract_strided_slice %0 {offsets = [0, 1], sizes = [32, 1], strides = [1, 1]} : vector<32x9xf32> to vector<32x1xf32>
    %36 = vector.broadcast %35 : vector<32x1xf32> to vector<32x256xf32>
    %37 = arith.mulf %34, %36 : vector<32x256xf32>
    %38 = arith.addf %28, %37 : vector<32x256xf32>
    %39 = vector.extract_strided_slice %16 {offsets = [0, 241], sizes = [32, 15], strides = [1, 1]} : vector<32x256xf32> to vector<32x15xf32>
    %40 = vector.extract_strided_slice %16 {offsets = [0, 0], sizes = [32, 241], strides = [1, 1]} : vector<32x256xf32> to vector<32x241xf32>
    %41 = tpu.concatenate %39, %40 in 1 : vector<32x15xf32>, vector<32x241xf32> -> vector<32x256xf32>
    %42 = vector.extract_strided_slice %1 {offsets = [2, 0], sizes = [1, 256], strides = [1, 1]} : vector<9x256xf32> to vector<1x256xf32>
    %43 = vector.broadcast %42 : vector<1x256xf32> to vector<32x256xf32>
    %44 = arith.mulf %41, %43 : vector<32x256xf32>
    %45 = vector.extract_strided_slice %0 {offsets = [0, 2], sizes = [32, 1], strides = [1, 1]} : vector<32x9xf32> to vector<32x1xf32>
    %46 = vector.broadcast %45 : vector<32x1xf32> to vector<32x256xf32>
    %47 = arith.mulf %44, %46 : vector<32x256xf32>
    %48 = arith.addf %38, %47 : vector<32x256xf32>
    %49 = vector.extract_strided_slice %16 {offsets = [0, 255], sizes = [32, 1], strides = [1, 1]} : vector<32x256xf32> to vector<32x1xf32>
    %50 = vector.extract_strided_slice %16 {offsets = [0, 0], sizes = [32, 255], strides = [1, 1]} : vector<32x256xf32> to vector<32x255xf32>
    %51 = tpu.concatenate %49, %50 in 1 : vector<32x1xf32>, vector<32x255xf32> -> vector<32x256xf32>
    %52 = vector.extract_strided_slice %1 {offsets = [3, 0], sizes = [1, 256], strides = [1, 1]} : vector<9x256xf32> to vector<1x256xf32>
    %53 = vector.broadcast %52 : vector<1x256xf32> to vector<32x256xf32>
    %54 = arith.mulf %51, %53 : vector<32x256xf32>
    %55 = vector.extract_strided_slice %0 {offsets = [0, 3], sizes = [32, 1], strides = [1, 1]} : vector<32x9xf32> to vector<32x1xf32>
    %56 = vector.broadcast %55 : vector<32x1xf32> to vector<32x256xf32>
    %57 = arith.mulf %54, %56 : vector<32x256xf32>
    %58 = arith.addf %48, %57 : vector<32x256xf32>
    %59 = vector.extract_strided_slice %0 {offsets = [0, 4], sizes = [32, 1], strides = [1, 1]} : vector<32x9xf32> to vector<32x1xf32>
    %60 = vector.broadcast %59 : vector<32x1xf32> to vector<32x256xf32>
    %61 = arith.mulf %16, %60 : vector<32x256xf32>
    %62 = arith.addf %58, %61 : vector<32x256xf32>
    %63 = vector.extract_strided_slice %16 {offsets = [0, 1], sizes = [32, 255], strides = [1, 1]} : vector<32x256xf32> to vector<32x255xf32>
    %64 = vector.extract_strided_slice %16 {offsets = [0, 0], sizes = [32, 1], strides = [1, 1]} : vector<32x256xf32> to vector<32x1xf32>
    %65 = tpu.concatenate %63, %64 in 1 : vector<32x255xf32>, vector<32x1xf32> -> vector<32x256xf32>
    %66 = vector.extract_strided_slice %1 {offsets = [5, 0], sizes = [1, 256], strides = [1, 1]} : vector<9x256xf32> to vector<1x256xf32>
    %67 = vector.broadcast %66 : vector<1x256xf32> to vector<32x256xf32>
    %68 = arith.mulf %65, %67 : vector<32x256xf32>
    %69 = vector.extract_strided_slice %0 {offsets = [0, 5], sizes = [32, 1], strides = [1, 1]} : vector<32x9xf32> to vector<32x1xf32>
    %70 = vector.broadcast %69 : vector<32x1xf32> to vector<32x256xf32>
    %71 = arith.mulf %68, %70 : vector<32x256xf32>
    %72 = arith.addf %62, %71 : vector<32x256xf32>
    %73 = vector.extract_strided_slice %16 {offsets = [0, 15], sizes = [32, 241], strides = [1, 1]} : vector<32x256xf32> to vector<32x241xf32>
    %74 = vector.extract_strided_slice %16 {offsets = [0, 0], sizes = [32, 15], strides = [1, 1]} : vector<32x256xf32> to vector<32x15xf32>
    %75 = tpu.concatenate %73, %74 in 1 : vector<32x241xf32>, vector<32x15xf32> -> vector<32x256xf32>
    %76 = vector.extract_strided_slice %1 {offsets = [6, 0], sizes = [1, 256], strides = [1, 1]} : vector<9x256xf32> to vector<1x256xf32>
    %77 = vector.broadcast %76 : vector<1x256xf32> to vector<32x256xf32>
    %78 = arith.mulf %75, %77 : vector<32x256xf32>
    %79 = vector.extract_strided_slice %0 {offsets = [0, 6], sizes = [32, 1], strides = [1, 1]} : vector<32x9xf32> to vector<32x1xf32>
    %80 = vector.broadcast %79 : vector<32x1xf32> to vector<32x256xf32>
    %81 = arith.mulf %78, %80 : vector<32x256xf32>
    %82 = arith.addf %72, %81 : vector<32x256xf32>
    %83 = vector.extract_strided_slice %16 {offsets = [0, 16], sizes = [32, 240], strides = [1, 1]} : vector<32x256xf32> to vector<32x240xf32>
    %84 = vector.extract_strided_slice %16 {offsets = [0, 0], sizes = [32, 16], strides = [1, 1]} : vector<32x256xf32> to vector<32x16xf32>
    %85 = tpu.concatenate %83, %84 in 1 : vector<32x240xf32>, vector<32x16xf32> -> vector<32x256xf32>
    %86 = vector.extract_strided_slice %1 {offsets = [7, 0], sizes = [1, 256], strides = [1, 1]} : vector<9x256xf32> to vector<1x256xf32>
    %87 = vector.broadcast %86 : vector<1x256xf32> to vector<32x256xf32>
    %88 = arith.mulf %85, %87 : vector<32x256xf32>
    %89 = vector.extract_strided_slice %0 {offsets = [0, 7], sizes = [32, 1], strides = [1, 1]} : vector<32x9xf32> to vector<32x1xf32>
    %90 = vector.broadcast %89 : vector<32x1xf32> to vector<32x256xf32>
    %91 = arith.mulf %88, %90 : vector<32x256xf32>
    %92 = arith.addf %82, %91 : vector<32x256xf32>
    %93 = vector.extract_strided_slice %16 {offsets = [0, 17], sizes = [32, 239], strides = [1, 1]} : vector<32x256xf32> to vector<32x239xf32>
    %94 = vector.extract_strided_slice %16 {offsets = [0, 0], sizes = [32, 17], strides = [1, 1]} : vector<32x256xf32> to vector<32x17xf32>
    %95 = tpu.concatenate %93, %94 in 1 : vector<32x239xf32>, vector<32x17xf32> -> vector<32x256xf32>
    %96 = vector.extract_strided_slice %1 {offsets = [8, 0], sizes = [1, 256], strides = [1, 1]} : vector<9x256xf32> to vector<1x256xf32>
    %97 = vector.broadcast %96 : vector<1x256xf32> to vector<32x256xf32>
    %98 = arith.mulf %95, %97 : vector<32x256xf32>
    %99 = vector.extract_strided_slice %0 {offsets = [0, 8], sizes = [32, 1], strides = [1, 1]} : vector<32x9xf32> to vector<32x1xf32>
    %100 = vector.broadcast %99 : vector<32x1xf32> to vector<32x256xf32>
    %101 = arith.mulf %98, %100 : vector<32x256xf32>
    %102 = arith.addf %92, %101 : vector<32x256xf32>
    %cst_18 = arith.constant 0.000000e+00 : f32
    %cst_19 = arith.constant 6.000000e+00 : f32
    %103 = vector.broadcast %cst_18 : f32 to vector<32x256xf32>
    %104 = arith.maximumf %103, %102 : vector<32x256xf32>
    %105 = vector.broadcast %cst_19 : f32 to vector<32x256xf32>
    %106 = arith.minimumf %105, %104 : vector<32x256xf32>
    %107 = arith.truncf %106 : vector<32x256xf32> to vector<32x256xbf16>
    %cst_20 = arith.constant dense<0.000000e+00> : vector<16x256xf32>
    %108 = tpu.matmul %2, %107, %cst_20 {dimension_numbers = #tpu.dot_dimension_numbers<[1], [0], [0], [1], [0, 0, 1, 1], [], []>} : vector<16x32xbf16>, vector<32x256xbf16>, vector<16x256xf32> -> vector<16x256xf32>
    %109 = vector.broadcast %4 : vector<16x1xf32> to vector<16x256xf32>
    %110 = arith.addf %108, %109 : vector<16x256xf32>
    %c0_21 = arith.constant 0 : index
    %c0_22 = arith.constant 0 : index
    %c0_23 = arith.constant 0 : index
    %111 = vector.load %arg9[%c0_21, %c0_22, %c0_23] : memref<1x16x256xf32, #tpu.memory_space<vmem>>, vector<1x16x256xf32>
    %112 = vector.shape_cast %111 : vector<1x16x256xf32> to vector<16x256xf32>
    %113 = vector.shape_cast %110 : vector<16x256xf32> to vector<1x16x256xf32>
    tpu.vector_store %arg9[%c0_21, %c0_22, %c0_23], %113 {strides = array<i32>} : memref<1x16x256xf32, #tpu.memory_space<vmem>>, vector<1x16x256xf32>,
    return
  }
  func.func @transform_0(%arg0: i32) -> (i32, i32, i32) {
    %c0_i32 = arith.constant 0 : i32
    %c0_i32_0 = arith.constant 0 : i32
    %c0_i32_1 = arith.constant 0 : i32
    return %arg0, %c0_i32, %c0_i32_0 : i32, i32, i32
  }
  func.func @transform_1(%arg0: i32) -> (i32, i32) {
    %c0_i32 = arith.constant 0 : i32
    %c0_i32_0 = arith.constant 0 : i32
    %c0_i32_1 = arith.constant 0 : i32
    return %c0_i32, %c0_i32_0 : i32, i32
  }
  func.func @transform_2(%arg0: i32) -> (i32, i32) {
    %c0_i32 = arith.constant 0 : i32
    %c0_i32_0 = arith.constant 0 : i32
    %c0_i32_1 = arith.constant 0 : i32
    return %c0_i32, %c0_i32_0 : i32, i32
  }
  func.func @transform_3(%arg0: i32) -> (i32, i32) {
    %c0_i32 = arith.constant 0 : i32
    %c0_i32_0 = arith.constant 0 : i32
    %c0_i32_1 = arith.constant 0 : i32
    return %c0_i32, %c0_i32_0 : i32, i32
  }
  func.func @transform_4(%arg0: i32) -> (i32, i32) {
    %c0_i32 = arith.constant 0 : i32
    %c0_i32_0 = arith.constant 0 : i32
    %c0_i32_1 = arith.constant 0 : i32
    return %c0_i32, %c0_i32_0 : i32, i32
  }
  func.func @transform_5(%arg0: i32) -> (i32, i32) {
    %c0_i32 = arith.constant 0 : i32
    %c0_i32_0 = arith.constant 0 : i32
    %c0_i32_1 = arith.constant 0 : i32
    return %c0_i32, %c0_i32_0 : i32, i32
  }
  func.func @transform_6(%arg0: i32) -> (i32, i32) {
    %c0_i32 = arith.constant 0 : i32
    %c0_i32_0 = arith.constant 0 : i32
    %c0_i32_1 = arith.constant 0 : i32
    return %c0_i32, %c0_i32_0 : i32, i32
  }
  func.func @transform_7(%arg0: i32) -> (i32, i32) {
    %c0_i32 = arith.constant 0 : i32
    %c0_i32_0 = arith.constant 0 : i32
    %c0_i32_1 = arith.constant 0 : i32
    return %c0_i32, %c0_i32_0 : i32, i32
  }
  func.func @transform_8(%arg0: i32) -> (i32, i32, i32) {
    %c0_i32 = arith.constant 0 : i32
    %c0_i32_0 = arith.constant 0 : i32
    %c0_i32_1 = arith.constant 0 : i32
    return %arg0, %c0_i32, %c0_i32_0 : i32, i32, i32
  }
}

</mosaic_0001>

<llo_original>
// kernel: tpu_custom_call.1
$region0: #{tpu_custom_call.1}
  #allocation0 [shape = 'u32[]', space=smem, size = 0x4, offset = 0x4, fixed_abs, tag = 'smem constant byte address 0x4 - core index']
  #allocation1 [shape = 'u32[144,128]{1,0:T(1,128)}', space=vmem, size = 0x12000, scoped, tag = 'internal scratch']
  %s0 = inlined_call_operand.vmem [shape: f32[2,8,256], index: 0, kind: input, shape index: {}]
  %s1 = inlined_call_operand.vmem [shape: bf16[32,8], index: 1, kind: input, shape index: {}]
  %s2 = inlined_call_operand.vmem [shape: f32[32,1], index: 2, kind: input, shape index: {}]
  %s3 = inlined_call_operand.vmem [shape: f32[32,9], index: 3, kind: input, shape index: {}]
  %s4 = inlined_call_operand.vmem [shape: f32[32,1], index: 4, kind: input, shape index: {}]
  %s5 = inlined_call_operand.vmem [shape: f32[9,256], index: 5, kind: input, shape index: {}]
  %s6 = inlined_call_operand.vmem [shape: bf16[16,32], index: 6, kind: input, shape index: {}]
  %s7 = inlined_call_operand.vmem [shape: f32[16,1], index: 7, kind: input, shape index: {}]
  %s8 = inlined_call_operand.hbm [shape: f32[2,16,256], index: 8, kind: output, shape index: {}]
  %s9 = sld [smem:[#allocation0]]
  $region65: #{tpu_custom_call.1} parent=0
    _
  %s11 = ssub.s32 1, %s9
  %s12 = scalar_select 0, %s11, %s9
  $region1: #{tpu_custom_call.1} parent=0
    #allocation2 [shape = 'u8[32768]{0}', space=vmem, size = 0x8000, scoped, tag = 'output window, operand 0']
    #allocation3 [shape = 's32[2]{0}', space=sflag, size = 0x8, scoped, tag = 'scoped memory for tpu_custom_call.1']
    %13 = vsyncpa [#allocation3], 0
    %s14 = scalar_lea.sflag [#allocation3], 1
    %15 = vsyncpa %s14, 0
    loop: start=0, step=1, limit=4
    $region2: #{tpu_custom_call.1} parent=1 // loop_pre_header
      _
    $region3: #{tpu_custom_call.1} parent=1 // loop_header
      %s17 = sphi 0, %s21
      %p18 = scmp.ge.s32.totalorder %s17, 4
      %s27 = sphi 0, %s29
      %s30 = sphi 0, %s27
      %s31 = sphi 0, %s30
      %s47 = sphi 0, %s31
      %s51 = sphi 0, %s51
      %s53 = sphi 0, %s51
      %s54 = sphi 0, %s53
      %s68 = sphi 0, %s54
      %s72 = sphi 0, %s72
      %s74 = sphi 0, %s72
      %s75 = sphi 0, %s74
      %s89 = sphi 0, %s75
      %s93 = sphi 0, %s93
      %s95 = sphi 0, %s93
      %s96 = sphi 0, %s95
      %s110 = sphi 0, %s96
      %s114 = sphi 0, %s114
      %s116 = sphi 0, %s114
      %s117 = sphi 0, %s116
      %s131 = sphi 0, %s117
      %s135 = sphi 0, %s135
      %s137 = sphi 0, %s135
      %s138 = sphi 0, %s137
      %s152 = sphi 0, %s138
      %s156 = sphi 0, %s156
      %s158 = sphi 0, %s156
      %s159 = sphi 0, %s158
      %s173 = sphi 0, %s159
      %s177 = sphi 0, %s177
      %s179 = sphi 0, %s177
      %s180 = sphi 0, %s179
      %s194 = sphi 0, %s180
      %s200 = sphi 0, %s202
      %s203 = sphi 0, %s200
      %s204 = sphi 0, %s203
      %s220 = sphi 0, %s204
    $region4: #{tpu_custom_call.1} parent=1 // loop_header_branch
      %20 = sbr.rel (%p18) target = $region8
    $region5: #{tpu_custom_call.1} parent=1 // loop_body
      %s22 = ssub.s32 %s17, 1
      %s23 = ssub.s32 %s17, 2
      %s24 = sadd.s32 %s17, 1
      %s25 = ssub.s32 %s17, %s24
      %p26 = scmp.eq.s32.totalorder %s25, 0
      %s28 = sadd.s32 %s27, 1
      %s29 = scalar_select %p26, %s27, %s28
      %p32 = pneg %p26
      %p33 = scmp.eq.s32.totalorder %s17, 1
      %p34 = por %p32, %p33
      %p35 = scmp.ne.s32.totalorder %s27, %s30
      %p36 = scmp.eq.s32.totalorder %s17, 0
      %p37 = por %p35, %p36
      %p38 = scmp.ne.s32.totalorder %s27, %s30
      %p39 = scmp.eq.s32.totalorder %s22, 1
      %p40 = por %p38, %p39
      %p41 = scmp.ne.s32.totalorder %s30, %s31
      %p42 = scmp.eq.s32.totalorder %s22, 0
      %p43 = por %p41, %p42
      %p44 = scmp.ne.s32.totalorder %s30, %s31
      %p45 = scmp.eq.s32.totalorder %s23, 1
      %p46 = por %p44, %p45
      %p48 = scmp.ne.s32.totalorder %s31, %s47
      %p49 = scmp.eq.s32.totalorder %s23, 0
      %p50 = por %p48, %p49
      %s52 = sadd.s32 %s51, 1
      %p55 = scmp.eq.s32.totalorder %s17, 1
      %p56 = scmp.ne.s32.totalorder %s51, %s53
      %p57 = scmp.eq.s32.totalorder %s17, 0
      %p58 = por %p56, %p57
      %p59 = scmp.ne.s32.totalorder %s51, %s53
      %p60 = scmp.eq.s32.totalorder %s22, 1
      %p61 = por %p59, %p60
      %p62 = scmp.ne.s32.totalorder %s53, %s54
      %p63 = scmp.eq.s32.totalorder %s22, 0
      %p64 = por %p62, %p63
      %p65 = scmp.ne.s32.totalorder %s53, %s54
      %p66 = scmp.eq.s32.totalorder %s23, 1
      %p67 = por %p65, %p66
      %p69 = scmp.ne.s32.totalorder %s54, %s68
      %p70 = scmp.eq.s32.totalorder %s23, 0
      %p71 = por %p69, %p70
      %s73 = sadd.s32 %s72, 1
      %p76 = scmp.eq.s32.totalorder %s17, 1
      %p77 = scmp.ne.s32.totalorder %s72, %s74
      %p78 = scmp.eq.s32.totalorder %s17, 0
      %p79 = por %p77, %p78
      %p80 = scmp.ne.s32.totalorder %s72, %s74
      %p81 = scmp.eq.s32.totalorder %s22, 1
      %p82 = por %p80, %p81
      %p83 = scmp.ne.s32.totalorder %s74, %s75
      %p84 = scmp.eq.s32.totalorder %s22, 0
      %p85 = por %p83, %p84
      %p86 = scmp.ne.s32.totalorder %s74, %s75
      %p87 = scmp.eq.s32.totalorder %s23, 1
      %p88 = por %p86, %p87
      %p90 = scmp.ne.s32.totalorder %s75, %s89
      %p91 = scmp.eq.s32.totalorder %s23, 0
      %p92 = por %p90, %p91
      %s94 = sadd.s32 %s93, 1
      %p97 = scmp.eq.s32.totalorder %s17, 1
      %p98 = scmp.ne.s32.totalorder %s93, %s95
      %p99 = scmp.eq.s32.totalorder %s17, 0
      %p100 = por %p98, %p99
      %p101 = scmp.ne.s32.totalorder %s93, %s95
      %p102 = scmp.eq.s32.totalorder %s22, 1
      %p103 = por %p101, %p102
      %p104 = scmp.ne.s32.totalorder %s95, %s96
      %p105 = scmp.eq.s32.totalorder %s22, 0
      %p106 = por %p104, %p105
      %p107 = scmp.ne.s32.totalorder %s95, %s96
      %p108 = scmp.eq.s32.totalorder %s23, 1
      %p109 = por %p107, %p108
      %p111 = scmp.ne.s32.totalorder %s96, %s110
      %p112 = scmp.eq.s32.totalorder %s23, 0
      %p113 = por %p111, %p112
      %s115 = sadd.s32 %s114, 1
      %p118 = scmp.eq.s32.totalorder %s17, 1
      %p119 = scmp.ne.s32.totalorder %s114, %s116
      %p120 = scmp.eq.s32.totalorder %s17, 0
      %p121 = por %p119, %p120
      %p122 = scmp.ne.s32.totalorder %s114, %s116
      %p123 = scmp.eq.s32.totalorder %s22, 1
      %p124 = por %p122, %p123
      %p125 = scmp.ne.s32.totalorder %s116, %s117
      %p126 = scmp.eq.s32.totalorder %s22, 0
      %p127 = por %p125, %p126
      %p128 = scmp.ne.s32.totalorder %s116, %s117
      %p129 = scmp.eq.s32.totalorder %s23, 1
      %p130 = por %p128, %p129
      %p132 = scmp.ne.s32.totalorder %s117, %s131
      %p133 = scmp.eq.s32.totalorder %s23, 0
      %p134 = por %p132, %p133
      %s136 = sadd.s32 %s135, 1
      %p139 = scmp.eq.s32.totalorder %s17, 1
      %p140 = scmp.ne.s32.totalorder %s135, %s137
      %p141 = scmp.eq.s32.totalorder %s17, 0
      %p142 = por %p140, %p141
      %p143 = scmp.ne.s32.totalorder %s135, %s137
      %p144 = scmp.eq.s32.totalorder %s22, 1
      %p145 = por %p143, %p144
      %p146 = scmp.ne.s32.totalorder %s137, %s138
      %p147 = scmp.eq.s32.totalorder %s22, 0
      %p148 = por %p146, %p147
      %p149 = scmp.ne.s32.totalorder %s137, %s138
      %p150 = scmp.eq.s32.totalorder %s23, 1
      %p151 = por %p149, %p150
      %p153 = scmp.ne.s32.totalorder %s138, %s152
      %p154 = scmp.eq.s32.totalorder %s23, 0
      %p155 = por %p153, %p154
      %s157 = sadd.s32 %s156, 1
      %p160 = scmp.eq.s32.totalorder %s17, 1
      %p161 = scmp.ne.s32.totalorder %s156, %s158
      %p162 = scmp.eq.s32.totalorder %s17, 0
      %p163 = por %p161, %p162
      %p164 = scmp.ne.s32.totalorder %s156, %s158
      %p165 = scmp.eq.s32.totalorder %s22, 1
      %p166 = por %p164, %p165
      %p167 = scmp.ne.s32.totalorder %s158, %s159
      %p168 = scmp.eq.s32.totalorder %s22, 0
      %p169 = por %p167, %p168
      %p170 = scmp.ne.s32.totalorder %s158, %s159
      %p171 = scmp.eq.s32.totalorder %s23, 1
      %p172 = por %p170, %p171
      %p174 = scmp.ne.s32.totalorder %s159, %s173
      %p175 = scmp.eq.s32.totalorder %s23, 0
      %p176 = por %p174, %p175
      %s178 = sadd.s32 %s177, 1
      %p181 = scmp.eq.s32.totalorder %s17, 1
      %p182 = scmp.ne.s32.totalorder %s177, %s179
      %p183 = scmp.eq.s32.totalorder %s17, 0
      %p184 = por %p182, %p183
      %p185 = scmp.ne.s32.totalorder %s177, %s179
      %p186 = scmp.eq.s32.totalorder %s22, 1
      %p187 = por %p185, %p186
      %p188 = scmp.ne.s32.totalorder %s179, %s180
      %p189 = scmp.eq.s32.totalorder %s22, 0
      %p190 = por %p188, %p189
      %p191 = scmp.ne.s32.totalorder %s179, %s180
      %p192 = scmp.eq.s32.totalorder %s23, 1
      %p193 = por %p191, %p192
      %p195 = scmp.ne.s32.totalorder %s180, %s194
      %p196 = scmp.eq.s32.totalorder %s23, 0
      %p197 = por %p195, %p196
      %s198 = ssub.s32 %s17, %s24
      %p199 = scmp.eq.s32.totalorder %s198, 0
      %s201 = sadd.s32 %s200, 1
      %s202 = scalar_select %p199, %s200, %s201
      %p205 = pneg %p199
      %p206 = scmp.eq.s32.totalorder %s17, 1
      %p207 = por %p205, %p206
      %p208 = scmp.ne.s32.totalorder %s200, %s203
      %p209 = scmp.eq.s32.totalorder %s17, 0
      %p210 = por %p208, %p209
      %p211 = scmp.ne.s32.totalorder %s200, %s203
      %p212 = scmp.eq.s32.totalorder %s22, 1
      %p213 = por %p211, %p212
      %p214 = scmp.ne.s32.totalorder %s203, %s204
      %p215 = scmp.eq.s32.totalorder %s22, 0
      %p216 = por %p214, %p215
      %p217 = scmp.ne.s32.totalorder %s203, %s204
      %p218 = scmp.eq.s32.totalorder %s23, 1
      %p219 = por %p217, %p218
      %p221 = scmp.ne.s32.totalorder %s204, %s220
      %p222 = scmp.eq.s32.totalorder %s23, 0
      %p223 = por %p221, %p222
      %p224 = scmp.le.s32.totalorder 1, %s17
      %p225 = scmp.lt.s32.totalorder %s17, 3
      %p226 = pnand %p224, %p225
      %p227 = pneg %p226
      // Predicated region
      $region9: #{tpu_custom_call.1} parent=5 // pred_check
        _
      $region10: #{tpu_custom_call.1} parent=5 // pred_check_branch
        %229 = sbr.rel (%p226) target = $region12
      $region11: #{tpu_custom_call.1} parent=5 // pred_region
        %s230 = ssub.s32 %s17, 1
        // Predicated region
        $region13: #{tpu_custom_call.1} parent=11 // pred_check
          %p231 = pneg %p64
        $region14: #{tpu_custom_call.1} parent=11 // pred_check_branch
          %233 = sbr.rel (%p231) target = $region16
        $region15: #{tpu_custom_call.1} parent=11 // pred_region
          _
        $region16: #{tpu_custom_call.1} parent=11 // pred_fallthru
          _
        // Predicated region
        $region17: #{tpu_custom_call.1} parent=11 // pred_check
          %p234 = pneg %p85
        $region18: #{tpu_custom_call.1} parent=11 // pred_check_branch
          %236 = sbr.rel (%p234) target = $region20
        $region19: #{tpu_custom_call.1} parent=11 // pred_region
          _
        $region20: #{tpu_custom_call.1} parent=11 // pred_fallthru
          _
        // Predicated region
        $region21: #{tpu_custom_call.1} parent=11 // pred_check
          %p237 = pneg %p106
        $region22: #{tpu_custom_call.1} parent=11 // pred_check_branch
          %239 = sbr.rel (%p237) target = $region24
        $region23: #{tpu_custom_call.1} parent=11 // pred_region
          _
        $region24: #{tpu_custom_call.1} parent=11 // pred_fallthru
          _
        // Predicated region
        $region25: #{tpu_custom_call.1} parent=11 // pred_check
          %p240 = pneg %p127
        $region26: #{tpu_custom_call.1} parent=11 // pred_check_branch
          %242 = sbr.rel (%p240) target = $region28
        $region27: #{tpu_custom_call.1} parent=11 // pred_region
          _
        $region28: #{tpu_custom_call.1} parent=11 // pred_fallthru
          _
        // Predicated region
        $region29: #{tpu_custom_call.1} parent=11 // pred_check
          %p243 = pneg %p148
        $region30: #{tpu_custom_call.1} parent=11 // pred_check_branch
          %245 = sbr.rel (%p243) target = $region32
        $region31: #{tpu_custom_call.1} parent=11 // pred_region
          _
        $region32: #{tpu_custom_call.1} parent=11 // pred_fallthru
          _
        // Predicated region
        $region33: #{tpu_custom_call.1} parent=11 // pred_check
          %p246 = pneg %p169
        $region34: #{tpu_custom_call.1} parent=11 // pred_check_branch
          %248 = sbr.rel (%p246) target = $region36
        $region35: #{tpu_custom_call.1} parent=11 // pred_region
          _
        $region36: #{tpu_custom_call.1} parent=11 // pred_fallthru
          _
        // Predicated region
        $region37: #{tpu_custom_call.1} parent=11 // pred_check
          %p249 = pneg %p190
        $region38: #{tpu_custom_call.1} parent=11 // pred_check_branch
          %251 = sbr.rel (%p249) target = $region40
        $region39: #{tpu_custom_call.1} parent=11 // pred_region
          _
        $region40: #{tpu_custom_call.1} parent=11 // pred_fallthru
          _
      $region12: #{tpu_custom_call.1} parent=5 // pred_fallthru
        _
      %p252 = scmp.lt.s32.totalorder %s17, 2
      // Predicated region
      $region41: #{tpu_custom_call.1} parent=5 // pred_check
        %p253 = pneg %p252
      $region42: #{tpu_custom_call.1} parent=5 // pred_check_branch
        %255 = sbr.rel (%p253) target = $region44
      $region43: #{tpu_custom_call.1} parent=5 // pred_region
        // Predicated region
        $region45: #{tpu_custom_call.1} parent=43 // pred_check
          %p256 = pneg %p37
        $region46: #{tpu_custom_call.1} parent=43 // pred_check_branch
          %258 = sbr.rel (%p256) target = $region48
        $region47: #{tpu_custom_call.1} parent=43 // pred_region
          %p259 = scmp.lt.s32.totalorder %s17, 1
          %s260 = scalar_select %p259, %s17, 1
          %s261 = smul.addr %s260, 2
          %s262 = smul.addr %s261, 8
          %s263 = scalar_lea.vmem %s0, %s262
        $region48: #{tpu_custom_call.1} parent=43 // pred_fallthru
          _
      $region44: #{tpu_custom_call.1} parent=5 // pred_fallthru
        _
      %p264 = scmp.le.s32.totalorder 1, %s17
      %p265 = scmp.lt.s32.totalorder %s17, 3
      %p266 = pnand %p264, %p265
      %p267 = pneg %p266
      // Predicated region
      $region49: #{tpu_custom_call.1} parent=5 // pred_check
        _
      $region50: #{tpu_custom_call.1} parent=5 // pred_check_branch
        %269 = sbr.rel (%p266) target = $region52
      $region51: #{tpu_custom_call.1} parent=5 // pred_region
        %s270 = ssub.s32 %s17, 1
        %p271 = scmp.lt.s32.totalorder %s22, 1
        %s272 = scalar_select %p271, %s22, 1
        %s273 = smul.addr %s272, 2
        %s274 = smul.addr %s273, 8
        %s275 = scalar_lea.vmem %s0, %s274
        %p276 = pneg %p43
        %p277 = pneg %p40
        %p278 = pneg %p64
        %p279 = pneg %p61
        %p280 = pneg %p85
        %p281 = pneg %p82
        %p282 = pneg %p106
        %p283 = pneg %p103
        %p284 = pneg %p127
        %p285 = pneg %p124
        %p286 = pneg %p148
        %p287 = pneg %p145
        %p288 = pneg %p169
        %p289 = pneg %p166
        %p290 = pneg %p190
        %p291 = pneg %p187
        %p292 = pneg %p216
        %p293 = pneg %p213
        %s294 = sand.u32 %s203, 1
        %s295 = scalar_lea.sflag [#allocation3], %s294
        %s296 = sand.u32 %s203, 1
        %s297 = smul.addr %s296, 32
        %s298 = scalar_lea.vmem [#allocation2], %s297
        %p299 = scmp.lt.s32.totalorder %s22, 1
        %s300 = scalar_select %p299, %s22, 1
        %s301 = smul.addr %s300, 2
        %s302 = smul.addr %s301, 8
        %s303 = scalar_lea.vmem %s0, %s302
        %v305 = vld [vmem:[%s3] sm:$0xff]
        %v306 = vld [vmem:[%s3 + $0x8] sm:$0xff]
        %v307 = vld [vmem:[%s3 + $0x10] sm:$0xff]
        %v308 = vld [vmem:[%s3 + $0x18] sm:$0xff]
        %v309 = vld [vmem:[%s5] sm:$0xff]
        %v310 = vld [vmem:[%s5 + $0x8] sm:$0xff]
        %v311 = vld [vmem:[%s5 + $0x10] sm:$0x1]
        %v312 = vld [vmem:[%s5 + $0x18] sm:$0x1]
        %v313 = vld [vmem:[%s6] sm:$0xf]
        %v314 = vld [vmem:[%s6 + $0x4] sm:$0xf]
        %v315 = vld [vmem:[%s4] sm:$0xff]
        %v316 = vld [vmem:[%s4 + $0x8] sm:$0xff]
        %v317 = vld [vmem:[%s4 + $0x10] sm:$0xff]
        %v318 = vld [vmem:[%s4 + $0x18] sm:$0xff]
        %v319 = vld [vmem:[%s7] sm:$0xff]
        %v320 = vld [vmem:[%s7 + $0x8] sm:$0xff]
        %v321 = vld [vmem:[%s1] sm:$0xf]
        %v322 = vld [vmem:[%s1 + $0x4] sm:$0xf]
        %v323 = vld [vmem:[%s1 + $0x8] sm:$0xf]
        %v324 = vld [vmem:[%s1 + $0xc] sm:$0xf]
        %v325 = vld [vmem:[%s2] sm:$0xff]
        %v326 = vld [vmem:[%s2 + $0x8] sm:$0xff]
        %v327 = vld [vmem:[%s2 + $0x10] sm:$0xff]
        %v328 = vld [vmem:[%s2 + $0x18] sm:$0xff]
        %v329 = vld [vmem:[%s303] sm:$0xff]
        %v330 = vld [vmem:[%s303 + $0x8] sm:$0xff]
        %v331 = vpack.c.bf16 %v329, %v329
        %v332 = vpack.c.bf16 %v330, %v330
        %334 = vset.pattern.permute.xlu0 0
        %335 = vperm.xlu0 %334, %v325
        %v336 = vpop.permute.xlu0 %335
        %339 = vset.pattern.permute.xlu0 0
        %340 = vperm.xlu0 %339, %v326
        %v341 = vpop.permute.xlu0 %340
        %344 = vset.pattern.permute.xlu0 0
        %345 = vperm.xlu0 %344, %v327
        %v346 = vpop.permute.xlu0 %345
        %349 = vset.pattern.permute.xlu0 0
        %350 = vperm.xlu0 %349, %v328
        %v351 = vpop.permute.xlu0 %350
        %v357 = vunpack.c.l.b16 %v321
        %v358 = vunpack.c.l.b16 %v322
        %v359 = vunpack.c.l.b16 %v323
        %v360 = vunpack.c.l.b16 %v324
        %v361 = vpack.c.b16 %v358, %v357
        %v362 = vpack.c.b16 %v360, %v359
        %vm363 = vcmask 64512
        %v365 = vsel %vm363, %v361, 0
        %v368 = vsel %vm363, %v362, 0
        %vm370 = vcmask 1043456
        %v372 = vsel %vm370, %v331, 0
        %v375 = vsel %vm370, %v332, 0
        %377 = vmatprep.subr.bf16.mxu0 0
        %378 = vmatpush1.bf16.msra.mxu0 0
        %379 = vmatprep.subr.bf16.mxu0 0
        %380 = vmatpush1.bf16.msra.mxu0 0
        %381 = vmatprep.subr.bf16.mxu0 0
        %382 = vmatpush1.bf16.msra.mxu0 0
        %383 = vmatprep.subr.bf16.mxu0 0
        %384 = vmatpush1.bf16.msra.mxu0 0
        %385 = vmatprep.subr.bf16.mxu0 0
        %386 = vmatpush1.bf16.msra.mxu0 0
        %387 = vmatprep.subr.bf16.mxu0 0
        %388 = vmatpush1.bf16.msra.mxu0 0
        %389 = vmatprep.subr.bf16.mxu0 0
        %390 = vmatpush1.bf16.msra.mxu0 0
        %391 = vmatprep.subr.bf16.mxu0 %v375
        %392 = vmatpush1.bf16.msra.mxu0 %v372
        %393 = vmatprep.subr.bf16.mxu0 0
        %394 = vmatpush2.bf16.msra.mxu0 0
        %395 = vmatprep.subr.bf16.mxu0 0
        %396 = vmatpush2.bf16.msra.mxu0 0
        %397 = vmatprep.subr.bf16.mxu0 0
        %398 = vmatpush2.bf16.msra.mxu0 0
        %399 = vmatprep.subr.bf16.mxu0 0
        %400 = vmatpush2.bf16.msra.mxu0 0
        %401 = vmatprep.subr.bf16.mxu0 0
        %402 = vmatpush2.bf16.msra.mxu0 0
        %403 = vmatprep.subr.bf16.mxu0 0
        %404 = vmatpush2.bf16.msra.mxu0 0
        %405 = vmatprep.subr.bf16.mxu0 0
        %406 = vmatpush2.bf16.msra.mxu0 0
        %407 = vmatprep.subr.bf16.mxu0 0
        %408 = vmatpush2.bf16.msra.mxu0 0
        %409 = vmatprep.mubr.bf16.mxu0 0
        %410 = vmatmul.mubr.bf16.gmra.mxu0 %v365
        %v411 = vpop.f32.mrf.mxu0
        %v412 = vadd.f32 %v336, %v411
        %v413 = vpop.f32.mrf.mxu0
        %v414 = vadd.f32 %v336, %v413
        %v415 = vpop.f32.mrf.mxu0
        %v416 = vadd.f32 %v341, %v415
        %v417 = vpop.f32.mrf.mxu0
        %v418 = vadd.f32 %v341, %v417
        %419 = vmatprep.mubr.bf16.mxu0 0
        %420 = vmatmul.mubr.bf16.gmra.mxu0 %v368
        %v421 = vpop.f32.mrf.mxu0
        %v422 = vadd.f32 %v346, %v421
        %v423 = vpop.f32.mrf.mxu0
        %v424 = vadd.f32 %v346, %v423
        %v425 = vpop.f32.mrf.mxu0
        %v426 = vadd.f32 %v351, %v425
        %v427 = vpop.f32.mrf.mxu0
        %v428 = vadd.f32 %v351, %v427
        %429 = vdwg.mxu0
        %v430 = vmax.f32 %v412, 0.0
        %v431 = vmax.f32 %v414, 0.0
        %v432 = vmax.f32 %v416, 0.0
        %v433 = vmax.f32 %v418, 0.0
        %v434 = vmax.f32 %v422, 0.0
        %v435 = vmax.f32 %v424, 0.0
        %v436 = vmax.f32 %v426, 0.0
        %v437 = vmax.f32 %v428, 0.0
        %v438 = vmin.f32 %v430, 6.0
        %v439 = vmin.f32 %v431, 6.0
        %v440 = vmin.f32 %v432, 6.0
        %v441 = vmin.f32 %v433, 6.0
        %v442 = vmin.f32 %v434, 6.0
        %v443 = vmin.f32 %v435, 6.0
        %v444 = vmin.f32 %v436, 6.0
        %v445 = vmin.f32 %v437, 6.0
        %447 = vset.pattern.permute.xlu0 0
        %448 = vperm.xlu0 %447, %v315
        %v449 = vpop.permute.xlu0 %448
        %452 = vset.pattern.permute.xlu0 0
        %453 = vperm.xlu0 %452, %v316
        %v454 = vpop.permute.xlu0 %453
        %457 = vset.pattern.permute.xlu0 0
        %458 = vperm.xlu0 %457, %v317
        %v459 = vpop.permute.xlu0 %458
        %462 = vset.pattern.permute.xlu0 0
        %463 = vperm.xlu0 %462, %v318
        %v464 = vpop.permute.xlu0 %463
        %470 = vrot.lane.b32.xlu0 %v439, 17
        %v471 = vpop.permute.xlu0 %470
        %472 = vrot.lane.b32.xlu0 %v441, 17
        %v473 = vpop.permute.xlu0 %472
        %474 = vrot.lane.b32.xlu0 %v443, 17
        %v475 = vpop.permute.xlu0 %474
        %476 = vrot.lane.b32.xlu0 %v445, 17
        %v477 = vpop.permute.xlu0 %476
        %486 = vrot.lane.b32.xlu0 %v438, 17
        %v487 = vpop.permute.xlu0 %486
        %488 = vrot.lane.b32.xlu0 %v440, 17
        %v489 = vpop.permute.xlu0 %488
        %490 = vrot.lane.b32.xlu0 %v442, 17
        %v491 = vpop.permute.xlu0 %490
        %492 = vrot.lane.b32.xlu0 %v444, 17
        %v493 = vpop.permute.xlu0 %492
        %vm494 = vcmask 138240
        %v495 = vsel %vm494, %v487, %v471
        %v496 = vsel %vm494, %v489, %v473
        %v497 = vsel %vm494, %v491, %v475
        %v498 = vsel %vm494, %v493, %v477
        %v507 = vsel %vm494, %v471, %v487
        %v508 = vsel %vm494, %v473, %v489
        %v509 = vsel %vm494, %v475, %v491
        %v510 = vsel %vm494, %v477, %v493
        %v511 = vlaneseq
        %v512 = vshrl.u32 %v511, 7
        %v513 = vsub.s32 0, %v512
        %v514 = vrot.slane %v309, %v513
        %v515 = vlaneseq
        %v516 = vshrl.u32 %v515, 7
        %v517 = vsub.s32 0, %v516
        %v518 = vrot.slane %v310, %v517
        %v519 = vmul.f32 %v507, %v514
        %v520 = vmul.f32 %v495, %v518
        %v521 = vmul.f32 %v508, %v514
        %v522 = vmul.f32 %v496, %v518
        %v523 = vmul.f32 %v509, %v514
        %v524 = vmul.f32 %v497, %v518
        %v525 = vmul.f32 %v510, %v514
        %v526 = vmul.f32 %v498, %v518
        %528 = vset.pattern.permute.xlu0 0
        %529 = vperm.xlu0 %528, %v305
        %v530 = vpop.permute.xlu0 %529
        %533 = vset.pattern.permute.xlu0 0
        %534 = vperm.xlu0 %533, %v306
        %v535 = vpop.permute.xlu0 %534
        %538 = vset.pattern.permute.xlu0 0
        %539 = vperm.xlu0 %538, %v307
        %v540 = vpop.permute.xlu0 %539
        %543 = vset.pattern.permute.xlu0 0
        %544 = vperm.xlu0 %543, %v308
        %v545 = vpop.permute.xlu0 %544
        %v547 = vmul.f32 %v519, %v530
        %v548 = vmul.f32 %v520, %v530
        %v549 = vmul.f32 %v521, %v535
        %v550 = vmul.f32 %v522, %v535
        %v551 = vmul.f32 %v523, %v540
        %v552 = vmul.f32 %v524, %v540
        %v553 = vmul.f32 %v525, %v545
        %v554 = vmul.f32 %v526, %v545
        %v555 = vadd.f32 %v449, %v547
        %v556 = vadd.f32 %v449, %v548
        %v557 = vadd.f32 %v454, %v549
        %v558 = vadd.f32 %v454, %v550
        %v559 = vadd.f32 %v459, %v551
        %v560 = vadd.f32 %v459, %v552
        %v561 = vadd.f32 %v464, %v553
        %v562 = vadd.f32 %v464, %v554
        %563 = vrot.lane.b32.xlu0 %v439, 16
        %v564 = vpop.permute.xlu0 %563
        %565 = vrot.lane.b32.xlu0 %v441, 16
        %v566 = vpop.permute.xlu0 %565
        %567 = vrot.lane.b32.xlu0 %v443, 16
        %v568 = vpop.permute.xlu0 %567
        %569 = vrot.lane.b32.xlu0 %v445, 16
        %v570 = vpop.permute.xlu0 %569
        %575 = vrot.lane.b32.xlu0 %v438, 16
        %v576 = vpop.permute.xlu0 %575
        %577 = vrot.lane.b32.xlu0 %v440, 16
        %v578 = vpop.permute.xlu0 %577
        %579 = vrot.lane.b32.xlu0 %v442, 16
        %v580 = vpop.permute.xlu0 %579
        %581 = vrot.lane.b32.xlu0 %v444, 16
        %v582 = vpop.permute.xlu0 %581
        %vm583 = vcmask 130048
        %v584 = vsel %vm583, %v576, %v564
        %v585 = vsel %vm583, %v578, %v566
        %v586 = vsel %vm583, %v580, %v568
        %v587 = vsel %vm583, %v582, %v570
        %v596 = vsel %vm583, %v564, %v576
        %v597 = vsel %vm583, %v566, %v578
        %v598 = vsel %vm583, %v568, %v580
        %v599 = vsel %vm583, %v570, %v582
        %v600 = vlaneseq
        %v601 = vshrl.u32 %v600, 7
        %v602 = vsub.s32 1, %v601
        %v603 = vrot.slane %v309, %v602
        %v604 = vlaneseq
        %v605 = vshrl.u32 %v604, 7
        %v606 = vsub.s32 1, %v605
        %v607 = vrot.slane %v310, %v606
        %v608 = vmul.f32 %v596, %v603
        %v609 = vmul.f32 %v584, %v607
        %v610 = vmul.f32 %v597, %v603
        %v611 = vmul.f32 %v585, %v607
        %v612 = vmul.f32 %v598, %v603
        %v613 = vmul.f32 %v586, %v607
        %v614 = vmul.f32 %v599, %v603
        %v615 = vmul.f32 %v587, %v607
        %616 = vset.pattern.permute.xlu0 1
        %617 = vperm.xlu0 %616, %v305
        %v618 = vpop.permute.xlu0 %617
        %620 = vset.pattern.permute.xlu0 1
        %621 = vperm.xlu0 %620, %v306
        %v622 = vpop.permute.xlu0 %621
        %624 = vset.pattern.permute.xlu0 1
        %625 = vperm.xlu0 %624, %v307
        %v626 = vpop.permute.xlu0 %625
        %628 = vset.pattern.permute.xlu0 1
        %629 = vperm.xlu0 %628, %v308
        %v630 = vpop.permute.xlu0 %629
        %v632 = vmul.f32 %v608, %v618
        %v633 = vmul.f32 %v609, %v618
        %v634 = vmul.f32 %v610, %v622
        %v635 = vmul.f32 %v611, %v622
        %v636 = vmul.f32 %v612, %v626
        %v637 = vmul.f32 %v613, %v626
        %v638 = vmul.f32 %v614, %v630
        %v639 = vmul.f32 %v615, %v630
        %v640 = vadd.f32 %v555, %v632
        %v641 = vadd.f32 %v556, %v633
        %v642 = vadd.f32 %v557, %v634
        %v643 = vadd.f32 %v558, %v635
        %v644 = vadd.f32 %v559, %v636
        %v645 = vadd.f32 %v560, %v637
        %v646 = vadd.f32 %v561, %v638
        %v647 = vadd.f32 %v562, %v639
        %648 = vrot.lane.b32.xlu0 %v439, 15
        %v649 = vpop.permute.xlu0 %648
        %650 = vrot.lane.b32.xlu0 %v441, 15
        %v651 = vpop.permute.xlu0 %650
        %652 = vrot.lane.b32.xlu0 %v443, 15
        %v653 = vpop.permute.xlu0 %652
        %654 = vrot.lane.b32.xlu0 %v445, 15
        %v655 = vpop.permute.xlu0 %654
        %660 = vrot.lane.b32.xlu0 %v438, 15
        %v661 = vpop.permute.xlu0 %660
        %662 = vrot.lane.b32.xlu0 %v440, 15
        %v663 = vpop.permute.xlu0 %662
        %664 = vrot.lane.b32.xlu0 %v442, 15
        %v665 = vpop.permute.xlu0 %664
        %666 = vrot.lane.b32.xlu0 %v444, 15
        %v667 = vpop.permute.xlu0 %666
        %vm668 = vcmask 121856
        %v669 = vsel %vm668, %v661, %v649
        %v670 = vsel %vm668, %v663, %v651
        %v671 = vsel %vm668, %v665, %v653
        %v672 = vsel %vm668, %v667, %v655
        %v681 = vsel %vm668, %v649, %v661
        %v682 = vsel %vm668, %v651, %v663
        %v683 = vsel %vm668, %v653, %v665
        %v684 = vsel %vm668, %v655, %v667
        %v685 = vlaneseq
        %v686 = vshrl.u32 %v685, 7
        %v687 = vsub.s32 2, %v686
        %v688 = vrot.slane %v309, %v687
        %v689 = vlaneseq
        %v690 = vshrl.u32 %v689, 7
        %v691 = vsub.s32 2, %v690
        %v692 = vrot.slane %v310, %v691
        %v693 = vmul.f32 %v681, %v688
        %v694 = vmul.f32 %v669, %v692
        %v695 = vmul.f32 %v682, %v688
        %v696 = vmul.f32 %v670, %v692
        %v697 = vmul.f32 %v683, %v688
        %v698 = vmul.f32 %v671, %v692
        %v699 = vmul.f32 %v684, %v688
        %v700 = vmul.f32 %v672, %v692
        %701 = vset.pattern.permute.xlu0 2
        %702 = vperm.xlu0 %701, %v305
        %v703 = vpop.permute.xlu0 %702
        %705 = vset.pattern.permute.xlu0 2
        %706 = vperm.xlu0 %705, %v306
        %v707 = vpop.permute.xlu0 %706
        %709 = vset.pattern.permute.xlu0 2
        %710 = vperm.xlu0 %709, %v307
        %v711 = vpop.permute.xlu0 %710
        %713 = vset.pattern.permute.xlu0 2
        %714 = vperm.xlu0 %713, %v308
        %v715 = vpop.permute.xlu0 %714
        %v717 = vmul.f32 %v693, %v703
        %v718 = vmul.f32 %v694, %v703
        %v719 = vmul.f32 %v695, %v707
        %v720 = vmul.f32 %v696, %v707
        %v721 = vmul.f32 %v697, %v711
        %v722 = vmul.f32 %v698, %v711
        %v723 = vmul.f32 %v699, %v715
        %v724 = vmul.f32 %v700, %v715
        %v725 = vadd.f32 %v640, %v717
        %v726 = vadd.f32 %v641, %v718
        %v727 = vadd.f32 %v642, %v719
        %v728 = vadd.f32 %v643, %v720
        %v729 = vadd.f32 %v644, %v721
        %v730 = vadd.f32 %v645, %v722
        %v731 = vadd.f32 %v646, %v723
        %v732 = vadd.f32 %v647, %v724
        %733 = vrot.lane.b32.xlu0 %v439, 1
        %v734 = vpop.permute.xlu0 %733
        %735 = vrot.lane.b32.xlu0 %v441, 1
        %v736 = vpop.permute.xlu0 %735
        %737 = vrot.lane.b32.xlu0 %v443, 1
        %v738 = vpop.permute.xlu0 %737
        %739 = vrot.lane.b32.xlu0 %v445, 1
        %v740 = vpop.permute.xlu0 %739
        %745 = vrot.lane.b32.xlu0 %v438, 1
        %v746 = vpop.permute.xlu0 %745
        %747 = vrot.lane.b32.xlu0 %v440, 1
        %v748 = vpop.permute.xlu0 %747
        %749 = vrot.lane.b32.xlu0 %v442, 1
        %v750 = vpop.permute.xlu0 %749
        %751 = vrot.lane.b32.xlu0 %v444, 1
        %v752 = vpop.permute.xlu0 %751
        %vm753 = vcmask 7168
        %v754 = vsel %vm753, %v746, %v734
        %v755 = vsel %vm753, %v748, %v736
        %v756 = vsel %vm753, %v750, %v738
        %v757 = vsel %vm753, %v752, %v740
        %v766 = vsel %vm753, %v734, %v746
        %v767 = vsel %vm753, %v736, %v748
        %v768 = vsel %vm753, %v738, %v750
        %v769 = vsel %vm753, %v740, %v752
        %v770 = vlaneseq
        %v771 = vshrl.u32 %v770, 7
        %v772 = vsub.s32 3, %v771
        %v773 = vrot.slane %v309, %v772
        %v774 = vlaneseq
        %v775 = vshrl.u32 %v774, 7
        %v776 = vsub.s32 3, %v775
        %v777 = vrot.slane %v310, %v776
        %v778 = vmul.f32 %v766, %v773
        %v779 = vmul.f32 %v754, %v777
        %v780 = vmul.f32 %v767, %v773
        %v781 = vmul.f32 %v755, %v777
        %v782 = vmul.f32 %v768, %v773
        %v783 = vmul.f32 %v756, %v777
        %v784 = vmul.f32 %v769, %v773
        %v785 = vmul.f32 %v757, %v777
        %786 = vset.pattern.permute.xlu0 3
        %787 = vperm.xlu0 %786, %v305
        %v788 = vpop.permute.xlu0 %787
        %790 = vset.pattern.permute.xlu0 3
        %791 = vperm.xlu0 %790, %v306
        %v792 = vpop.permute.xlu0 %791
        %794 = vset.pattern.permute.xlu0 3
        %795 = vperm.xlu0 %794, %v307
        %v796 = vpop.permute.xlu0 %795
        %798 = vset.pattern.permute.xlu0 3
        %799 = vperm.xlu0 %798, %v308
        %v800 = vpop.permute.xlu0 %799
        %v802 = vmul.f32 %v778, %v788
        %v803 = vmul.f32 %v779, %v788
        %v804 = vmul.f32 %v780, %v792
        %v805 = vmul.f32 %v781, %v792
        %v806 = vmul.f32 %v782, %v796
        %v807 = vmul.f32 %v783, %v796
        %v808 = vmul.f32 %v784, %v800
        %v809 = vmul.f32 %v785, %v800
        %v810 = vadd.f32 %v725, %v802
        %v811 = vadd.f32 %v726, %v803
        %v812 = vadd.f32 %v727, %v804
        %v813 = vadd.f32 %v728, %v805
        %v814 = vadd.f32 %v729, %v806
        %v815 = vadd.f32 %v730, %v807
        %v816 = vadd.f32 %v731, %v808
        %v817 = vadd.f32 %v732, %v809
        %818 = vset.pattern.permute.xlu0 4
        %819 = vperm.xlu0 %818, %v305
        %v820 = vpop.permute.xlu0 %819
        %822 = vset.pattern.permute.xlu0 4
        %823 = vperm.xlu0 %822, %v306
        %v824 = vpop.permute.xlu0 %823
        %826 = vset.pattern.permute.xlu0 4
        %827 = vperm.xlu0 %826, %v307
        %v828 = vpop.permute.xlu0 %827
        %830 = vset.pattern.permute.xlu0 4
        %831 = vperm.xlu0 %830, %v308
        %v832 = vpop.permute.xlu0 %831
        %v834 = vmul.f32 %v438, %v820
        %v835 = vmul.f32 %v439, %v820
        %v836 = vmul.f32 %v440, %v824
        %v837 = vmul.f32 %v441, %v824
        %v838 = vmul.f32 %v442, %v828
        %v839 = vmul.f32 %v443, %v828
        %v840 = vmul.f32 %v444, %v832
        %v841 = vmul.f32 %v445, %v832
        %v842 = vadd.f32 %v810, %v834
        %v843 = vadd.f32 %v811, %v835
        %v844 = vadd.f32 %v812, %v836
        %v845 = vadd.f32 %v813, %v837
        %v846 = vadd.f32 %v814, %v838
        %v847 = vadd.f32 %v815, %v839
        %v848 = vadd.f32 %v816, %v840
        %v849 = vadd.f32 %v817, %v841
        %850 = vrot.lane.b32.xlu0 %v438, 127
        %v851 = vpop.permute.xlu0 %850
        %852 = vrot.lane.b32.xlu0 %v439, 127
        %v853 = vpop.permute.xlu0 %852
        %854 = vrot.lane.b32.xlu0 %v440, 127
        %v855 = vpop.permute.xlu0 %854
        %856 = vrot.lane.b32.xlu0 %v441, 127
        %v857 = vpop.permute.xlu0 %856
        %858 = vrot.lane.b32.xlu0 %v442, 127
        %v859 = vpop.permute.xlu0 %858
        %860 = vrot.lane.b32.xlu0 %v443, 127
        %v861 = vpop.permute.xlu0 %860
        %862 = vrot.lane.b32.xlu0 %v444, 127
        %v863 = vpop.permute.xlu0 %862
        %864 = vrot.lane.b32.xlu0 %v445, 127
        %v865 = vpop.permute.xlu0 %864
        %vm866 = vcmask 1039360
        %v867 = vsel %vm866, %v851, %v853
        %v868 = vsel %vm866, %v855, %v857
        %v869 = vsel %vm866, %v859, %v861
        %v870 = vsel %vm866, %v863, %v865
        %v883 = vsel %vm866, %v853, %v851
        %v884 = vsel %vm866, %v857, %v855
        %v885 = vsel %vm866, %v861, %v859
        %v886 = vsel %vm866, %v865, %v863
        %v887 = vlaneseq
        %v888 = vshrl.u32 %v887, 7
        %v889 = vsub.s32 5, %v888
        %v890 = vrot.slane %v309, %v889
        %v891 = vlaneseq
        %v892 = vshrl.u32 %v891, 7
        %v893 = vsub.s32 5, %v892
        %v894 = vrot.slane %v310, %v893
        %v895 = vmul.f32 %v867, %v890
        %v896 = vmul.f32 %v883, %v894
        %v897 = vmul.f32 %v868, %v890
        %v898 = vmul.f32 %v884, %v894
        %v899 = vmul.f32 %v869, %v890
        %v900 = vmul.f32 %v885, %v894
        %v901 = vmul.f32 %v870, %v890
        %v902 = vmul.f32 %v886, %v894
        %903 = vset.pattern.permute.xlu0 5
        %904 = vperm.xlu0 %903, %v305
        %v905 = vpop.permute.xlu0 %904
        %907 = vset.pattern.permute.xlu0 5
        %908 = vperm.xlu0 %907, %v306
        %v909 = vpop.permute.xlu0 %908
        %911 = vset.pattern.permute.xlu0 5
        %912 = vperm.xlu0 %911, %v307
        %v913 = vpop.permute.xlu0 %912
        %915 = vset.pattern.permute.xlu0 5
        %916 = vperm.xlu0 %915, %v308
        %v917 = vpop.permute.xlu0 %916
        %v919 = vmul.f32 %v895, %v905
        %v920 = vmul.f32 %v896, %v905
        %v921 = vmul.f32 %v897, %v909
        %v922 = vmul.f32 %v898, %v909
        %v923 = vmul.f32 %v899, %v913
        %v924 = vmul.f32 %v900, %v913
        %v925 = vmul.f32 %v901, %v917
        %v926 = vmul.f32 %v902, %v917
        %v927 = vadd.f32 %v842, %v919
        %v928 = vadd.f32 %v843, %v920
        %v929 = vadd.f32 %v844, %v921
        %v930 = vadd.f32 %v845, %v922
        %v931 = vadd.f32 %v846, %v923
        %v932 = vadd.f32 %v847, %v924
        %v933 = vadd.f32 %v848, %v925
        %v934 = vadd.f32 %v849, %v926
        %935 = vrot.lane.b32.xlu0 %v438, 113
        %v936 = vpop.permute.xlu0 %935
        %937 = vrot.lane.b32.xlu0 %v439, 113
        %v938 = vpop.permute.xlu0 %937
        %939 = vrot.lane.b32.xlu0 %v440, 113
        %v940 = vpop.permute.xlu0 %939
        %941 = vrot.lane.b32.xlu0 %v441, 113
        %v942 = vpop.permute.xlu0 %941
        %943 = vrot.lane.b32.xlu0 %v442, 113
        %v944 = vpop.permute.xlu0 %943
        %945 = vrot.lane.b32.xlu0 %v443, 113
        %v946 = vpop.permute.xlu0 %945
        %947 = vrot.lane.b32.xlu0 %v444, 113
        %v948 = vpop.permute.xlu0 %947
        %949 = vrot.lane.b32.xlu0 %v445, 113
        %v950 = vpop.permute.xlu0 %949
        %vm951 = vcmask 924672
        %v952 = vsel %vm951, %v936, %v938
        %v953 = vsel %vm951, %v940, %v942
        %v954 = vsel %vm951, %v944, %v946
        %v955 = vsel %vm951, %v948, %v950
        %v968 = vsel %vm951, %v938, %v936
        %v969 = vsel %vm951, %v942, %v940
        %v970 = vsel %vm951, %v946, %v944
        %v971 = vsel %vm951, %v950, %v948
        %v972 = vlaneseq
        %v973 = vshrl.u32 %v972, 7
        %v974 = vsub.s32 6, %v973
        %v975 = vrot.slane %v309, %v974
        %v976 = vlaneseq
        %v977 = vshrl.u32 %v976, 7
        %v978 = vsub.s32 6, %v977
        %v979 = vrot.slane %v310, %v978
        %v980 = vmul.f32 %v952, %v975
        %v981 = vmul.f32 %v968, %v979
        %v982 = vmul.f32 %v953, %v975
        %v983 = vmul.f32 %v969, %v979
        %v984 = vmul.f32 %v954, %v975
        %v985 = vmul.f32 %v970, %v979
        %v986 = vmul.f32 %v955, %v975
        %v987 = vmul.f32 %v971, %v979
        %988 = vset.pattern.permute.xlu0 6
        %989 = vperm.xlu0 %988, %v305
        %v990 = vpop.permute.xlu0 %989
        %992 = vset.pattern.permute.xlu0 6
        %993 = vperm.xlu0 %992, %v306
        %v994 = vpop.permute.xlu0 %993
        %996 = vset.pattern.permute.xlu0 6
        %997 = vperm.xlu0 %996, %v307
        %v998 = vpop.permute.xlu0 %997
        %1000 = vset.pattern.permute.xlu0 6
        %1001 = vperm.xlu0 %1000, %v308
        %v1002 = vpop.permute.xlu0 %1001
        %v1004 = vmul.f32 %v980, %v990
        %v1005 = vmul.f32 %v981, %v990
        %v1006 = vmul.f32 %v982, %v994
        %v1007 = vmul.f32 %v983, %v994
        %v1008 = vmul.f32 %v984, %v998
        %v1009 = vmul.f32 %v985, %v998
        %v1010 = vmul.f32 %v986, %v1002
        %v1011 = vmul.f32 %v987, %v1002
        %v1012 = vadd.f32 %v927, %v1004
        %v1013 = vadd.f32 %v928, %v1005
        %v1014 = vadd.f32 %v929, %v1006
        %v1015 = vadd.f32 %v930, %v1007
        %v1016 = vadd.f32 %v931, %v1008
        %v1017 = vadd.f32 %v932, %v1009
        %v1018 = vadd.f32 %v933, %v1010
        %v1019 = vadd.f32 %v934, %v1011
        %1020 = vrot.lane.b32.xlu0 %v438, 112
        %v1021 = vpop.permute.xlu0 %1020
        %1022 = vrot.lane.b32.xlu0 %v439, 112
        %v1023 = vpop.permute.xlu0 %1022
        %1024 = vrot.lane.b32.xlu0 %v440, 112
        %v1025 = vpop.permute.xlu0 %1024
        %1026 = vrot.lane.b32.xlu0 %v441, 112
        %v1027 = vpop.permute.xlu0 %1026
        %1028 = vrot.lane.b32.xlu0 %v442, 112
        %v1029 = vpop.permute.xlu0 %1028
        %1030 = vrot.lane.b32.xlu0 %v443, 112
        %v1031 = vpop.permute.xlu0 %1030
        %1032 = vrot.lane.b32.xlu0 %v444, 112
        %v1033 = vpop.permute.xlu0 %1032
        %1034 = vrot.lane.b32.xlu0 %v445, 112
        %v1035 = vpop.permute.xlu0 %1034
        %vm1036 = vcmask 916480
        %v1037 = vsel %vm1036, %v1021, %v1023
        %v1038 = vsel %vm1036, %v1025, %v1027
        %v1039 = vsel %vm1036, %v1029, %v1031
        %v1040 = vsel %vm1036, %v1033, %v1035
        %v1053 = vsel %vm1036, %v1023, %v1021
        %v1054 = vsel %vm1036, %v1027, %v1025
        %v1055 = vsel %vm1036, %v1031, %v1029
        %v1056 = vsel %vm1036, %v1035, %v1033
        %v1057 = vlaneseq
        %v1058 = vshrl.u32 %v1057, 7
        %v1059 = vsub.s32 7, %v1058
        %v1060 = vrot.slane %v309, %v1059
        %v1061 = vlaneseq
        %v1062 = vshrl.u32 %v1061, 7
        %v1063 = vsub.s32 7, %v1062
        %v1064 = vrot.slane %v310, %v1063
        %v1065 = vmul.f32 %v1037, %v1060
        %v1066 = vmul.f32 %v1053, %v1064
        %v1067 = vmul.f32 %v1038, %v1060
        %v1068 = vmul.f32 %v1054, %v1064
        %v1069 = vmul.f32 %v1039, %v1060
        %v1070 = vmul.f32 %v1055, %v1064
        %v1071 = vmul.f32 %v1040, %v1060
        %v1072 = vmul.f32 %v1056, %v1064
        %1073 = vset.pattern.permute.xlu0 7
        %1074 = vperm.xlu0 %1073, %v305
        %v1075 = vpop.permute.xlu0 %1074
        %1077 = vset.pattern.permute.xlu0 7
        %1078 = vperm.xlu0 %1077, %v306
        %v1079 = vpop.permute.xlu0 %1078
        %1081 = vset.pattern.permute.xlu0 7
        %1082 = vperm.xlu0 %1081, %v307
        %v1083 = vpop.permute.xlu0 %1082
        %1085 = vset.pattern.permute.xlu0 7
        %1086 = vperm.xlu0 %1085, %v308
        %v1087 = vpop.permute.xlu0 %1086
        %v1089 = vmul.f32 %v1065, %v1075
        %v1090 = vmul.f32 %v1066, %v1075
        %v1091 = vmul.f32 %v1067, %v1079
        %v1092 = vmul.f32 %v1068, %v1079
        %v1093 = vmul.f32 %v1069, %v1083
        %v1094 = vmul.f32 %v1070, %v1083
        %v1095 = vmul.f32 %v1071, %v1087
        %v1096 = vmul.f32 %v1072, %v1087
        %v1097 = vadd.f32 %v1012, %v1089
        %v1098 = vadd.f32 %v1013, %v1090
        %v1099 = vadd.f32 %v1014, %v1091
        %v1100 = vadd.f32 %v1015, %v1092
        %v1101 = vadd.f32 %v1016, %v1093
        %v1102 = vadd.f32 %v1017, %v1094
        %v1103 = vadd.f32 %v1018, %v1095
        %v1104 = vadd.f32 %v1019, %v1096
        %1105 = vrot.lane.b32.xlu0 %v438, 111
        %v1106 = vpop.permute.xlu0 %1105
        %1107 = vrot.lane.b32.xlu0 %v439, 111
        %v1108 = vpop.permute.xlu0 %1107
        %1109 = vrot.lane.b32.xlu0 %v440, 111
        %v1110 = vpop.permute.xlu0 %1109
        %1111 = vrot.lane.b32.xlu0 %v441, 111
        %v1112 = vpop.permute.xlu0 %1111
        %1113 = vrot.lane.b32.xlu0 %v442, 111
        %v1114 = vpop.permute.xlu0 %1113
        %1115 = vrot.lane.b32.xlu0 %v443, 111
        %v1116 = vpop.permute.xlu0 %1115
        %1117 = vrot.lane.b32.xlu0 %v444, 111
        %v1118 = vpop.permute.xlu0 %1117
        %1119 = vrot.lane.b32.xlu0 %v445, 111
        %v1120 = vpop.permute.xlu0 %1119
        %vm1121 = vcmask 908288
        %v1122 = vsel %vm1121, %v1106, %v1108
        %v1123 = vsel %vm1121, %v1110, %v1112
        %v1124 = vsel %vm1121, %v1114, %v1116
        %v1125 = vsel %vm1121, %v1118, %v1120
        %v1138 = vsel %vm1121, %v1108, %v1106
        %v1139 = vsel %vm1121, %v1112, %v1110
        %v1140 = vsel %vm1121, %v1116, %v1114
        %v1141 = vsel %vm1121, %v1120, %v1118
        %v1142 = vlaneseq
        %v1143 = vshrl.u32 %v1142, 7
        %v1144 = vsub.s32 0, %v1143
        %v1145 = vrot.slane %v311, %v1144
        %v1146 = vlaneseq
        %v1147 = vshrl.u32 %v1146, 7
        %v1148 = vsub.s32 0, %v1147
        %v1149 = vrot.slane %v312, %v1148
        %v1150 = vmul.f32 %v1122, %v1145
        %v1151 = vmul.f32 %v1138, %v1149
        %v1152 = vmul.f32 %v1123, %v1145
        %v1153 = vmul.f32 %v1139, %v1149
        %v1154 = vmul.f32 %v1124, %v1145
        %v1155 = vmul.f32 %v1140, %v1149
        %v1156 = vmul.f32 %v1125, %v1145
        %v1157 = vmul.f32 %v1141, %v1149
        %1158 = vset.pattern.permute.xlu0 8
        %1159 = vperm.xlu0 %1158, %v305
        %v1160 = vpop.permute.xlu0 %1159
        %1162 = vset.pattern.permute.xlu0 8
        %1163 = vperm.xlu0 %1162, %v306
        %v1164 = vpop.permute.xlu0 %1163
        %1166 = vset.pattern.permute.xlu0 8
        %1167 = vperm.xlu0 %1166, %v307
        %v1168 = vpop.permute.xlu0 %1167
        %1170 = vset.pattern.permute.xlu0 8
        %1171 = vperm.xlu0 %1170, %v308
        %v1172 = vpop.permute.xlu0 %1171
        %v1174 = vmul.f32 %v1150, %v1160
        %v1175 = vmul.f32 %v1151, %v1160
        %v1176 = vmul.f32 %v1152, %v1164
        %v1177 = vmul.f32 %v1153, %v1164
        %v1178 = vmul.f32 %v1154, %v1168
        %v1179 = vmul.f32 %v1155, %v1168
        %v1180 = vmul.f32 %v1156, %v1172
        %v1181 = vmul.f32 %v1157, %v1172
        %v1182 = vadd.f32 %v1097, %v1174
        %v1183 = vadd.f32 %v1098, %v1175
        %v1184 = vadd.f32 %v1099, %v1176
        %v1185 = vadd.f32 %v1100, %v1177
        %v1186 = vadd.f32 %v1101, %v1178
        %v1187 = vadd.f32 %v1102, %v1179
        %v1188 = vadd.f32 %v1103, %v1180
        %v1189 = vadd.f32 %v1104, %v1181
        %v1190 = vmax.f32 %v1182, 0.0
        %v1191 = vmax.f32 %v1183, 0.0
        %v1192 = vmax.f32 %v1184, 0.0
        %v1193 = vmax.f32 %v1185, 0.0
        %v1194 = vmax.f32 %v1186, 0.0
        %v1195 = vmax.f32 %v1187, 0.0
        %v1196 = vmax.f32 %v1188, 0.0
        %v1197 = vmax.f32 %v1189, 0.0
        %v1198 = vmin.f32 %v1190, 6.0
        %v1199 = vmin.f32 %v1191, 6.0
        %v1200 = vmin.f32 %v1192, 6.0
        %v1201 = vmin.f32 %v1193, 6.0
        %v1202 = vmin.f32 %v1194, 6.0
        %v1203 = vmin.f32 %v1195, 6.0
        %v1204 = vmin.f32 %v1196, 6.0
        %v1205 = vmin.f32 %v1197, 6.0
        %v1206 = vpack.c.bf16 %v1200, %v1198
        %v1207 = vpack.c.bf16 %v1201, %v1199
        %v1208 = vpack.c.bf16 %v1204, %v1202
        %v1209 = vpack.c.bf16 %v1205, %v1203
        %1211 = vset.pattern.permute.xlu0 0
        %1212 = vperm.xlu0 %1211, %v319
        %v1213 = vpop.permute.xlu0 %1212
        %1216 = vset.pattern.permute.xlu0 0
        %1217 = vperm.xlu0 %1216, %v320
        %v1218 = vpop.permute.xlu0 %1217
        %v1222 = vunpack.c.l.b16 %v313
        %v1223 = vunpack.c.l.b16 %v314
        %v1224 = vpack.c.b16 %v1223, %v1222
        %vm1225 = vcmask 261120
        %v1227 = vsel %vm1225, %v1224, 0
        %1229 = vmatprep.subr.bf16.mxu0 0
        %1230 = vmatpush1.bf16.msra.mxu0 0
        %1231 = vmatprep.subr.bf16.mxu0 0
        %1232 = vmatpush1.bf16.msra.mxu0 0
        %1233 = vmatprep.subr.bf16.mxu0 0
        %1234 = vmatpush1.bf16.msra.mxu0 0
        %1235 = vmatprep.subr.bf16.mxu0 0
        %1236 = vmatpush1.bf16.msra.mxu0 0
        %1237 = vmatprep.subr.bf16.mxu0 0
        %1238 = vmatpush1.bf16.msra.mxu0 0
        %1239 = vmatprep.subr.bf16.mxu0 0
        %1240 = vmatpush1.bf16.msra.mxu0 0
        %1241 = vmatprep.subr.bf16.mxu0 %v1209
        %1242 = vmatpush1.bf16.msra.mxu0 %v1208
        %1243 = vmatprep.subr.bf16.mxu0 %v1207
        %1244 = vmatpush1.bf16.msra.mxu0 %v1206
        %1245 = vmatprep.subr.bf16.mxu0 0
        %1246 = vmatpush2.bf16.msra.mxu0 0
        %1247 = vmatprep.subr.bf16.mxu0 0
        %1248 = vmatpush2.bf16.msra.mxu0 0
        %1249 = vmatprep.subr.bf16.mxu0 0
        %1250 = vmatpush2.bf16.msra.mxu0 0
        %1251 = vmatprep.subr.bf16.mxu0 0
        %1252 = vmatpush2.bf16.msra.mxu0 0
        %1253 = vmatprep.subr.bf16.mxu0 0
        %1254 = vmatpush2.bf16.msra.mxu0 0
        %1255 = vmatprep.subr.bf16.mxu0 0
        %1256 = vmatpush2.bf16.msra.mxu0 0
        %1257 = vmatprep.subr.bf16.mxu0 0
        %1258 = vmatpush2.bf16.msra.mxu0 0
        %1259 = vmatprep.subr.bf16.mxu0 0
        %1260 = vmatpush2.bf16.msra.mxu0 0
        %1261 = vmatprep.mubr.bf16.mxu0 0
        %1262 = vmatmul.mubr.bf16.gmra.mxu0 %v1227
        %v1263 = vpop.f32.mrf.mxu0
        %v1264 = vadd.f32 %v1213, %v1263
        %v1265 = vpop.f32.mrf.mxu0
        %v1266 = vadd.f32 %v1213, %v1265
        %v1267 = vpop.f32.mrf.mxu0
        %v1268 = vadd.f32 %v1218, %v1267
        %v1269 = vpop.f32.mrf.mxu0
        %v1270 = vadd.f32 %v1218, %v1269
        %1271 = vdwg.mxu0
        %1272 = vst [vmem:[%s298] sm:$0xff] %v1264
        %1273 = vst [vmem:[%s298 + $0x8] sm:$0xff] %v1266
        %1274 = vst [vmem:[%s298 + $0x10] sm:$0xff] %v1268
        %1275 = vst [vmem:[%s298 + $0x18] sm:$0xff] %v1270
        %s1276 = sand.u32 %s203, 1
        %s1277 = scalar_lea.sflag [#allocation3], %s1276
        %s1278 = sand.u32 %s203, 1
        %s1279 = smul.addr %s1278, 32
        %s1280 = scalar_lea.vmem [#allocation2], %s1279
        // Predicated region
        $region53: #{tpu_custom_call.1} parent=51 // pred_check
          %p1281 = pneg %p213
        $region54: #{tpu_custom_call.1} parent=51 // pred_check_branch
          %1283 = sbr.rel (%p1281) target = $region56
        $region55: #{tpu_custom_call.1} parent=51 // pred_region
          %s1285 = ssub.s32 512, 512
          %1286 = vsyncadd %s1277, %s1285
          %s1287 = smul.addr %s22, 4
          %s1288 = smul.addr %s1287, 128
          %s1289 = scalar_lea.hbm %s8, %s1288
          %s1290 = sshll.u32 %s1280, 4
          %s1291 = int_to_ptr.vmem [resolvable:$true] %s1290
          %1296 = dma.vmem_to_hbm [thread:$0]  %s1291, 512, %s1289, %s1277, 256, 256, 16
        $region56: #{tpu_custom_call.1} parent=51 // pred_fallthru
          _
      $region52: #{tpu_custom_call.1} parent=5 // pred_fallthru
        _
      %p1297 = scmp.le.s32.totalorder 2, %s17
      // Predicated region
      $region57: #{tpu_custom_call.1} parent=5 // pred_check
        %p1298 = pneg %p1297
      $region58: #{tpu_custom_call.1} parent=5 // pred_check_branch
        %1300 = sbr.rel (%p1298) target = $region60
      $region59: #{tpu_custom_call.1} parent=5 // pred_region
        %s1301 = ssub.s32 %s17, 2
        // Predicated region
        $region61: #{tpu_custom_call.1} parent=59 // pred_check
          %p1302 = pneg %p219
        $region62: #{tpu_custom_call.1} parent=59 // pred_check_branch
          %1304 = sbr.rel (%p1302) target = $region64
        $region63: #{tpu_custom_call.1} parent=59 // pred_region
          %s1305 = sand.u32 %s204, 1
          %s1306 = scalar_lea.sflag [#allocation3], %s1305
          %s1307 = sand.u32 %s204, 1
          %s1308 = smul.addr %s1307, 32
          %s1309 = scalar_lea.vmem [#allocation2], %s1308
          %1310 = dma.done %s1306, 512
        $region64: #{tpu_custom_call.1} parent=59 // pred_fallthru
          _
      $region60: #{tpu_custom_call.1} parent=5 // pred_fallthru
        _
    $region6: #{tpu_custom_call.1} parent=1 // loop_footer
      %s21 = sadd.s32 1, %s17
    $region7: #{tpu_custom_call.1} parent=1 // loop_footer_branch
      %16 = sbr.rel target = $region3
    $region8: #{tpu_custom_call.1} parent=1 // loop_exit
      _
    %1311 = vsyncpa [#allocation3], 1
    %s1312 = scalar_lea.sflag [#allocation3], 1
    %1313 = vsyncpa %s1312, 1

</llo_original>
